<compile_context>
chip_gen: v6e
topology: v6e:2x2x1
jax: 0.10.0
libtpu: 0.0.40
codegen_flags: <defaults>
</compile_context>

<pallas_src>
import functools
import math

import jax
import jax.numpy as jnp
from jax.experimental import pallas as pl
from jax.experimental.pallas import tpu as pltpu


_LANE = 128
_TARGET_TILE_BYTES = 6 * 1024 * 1024    # per x / o tile (4 double-buffered tiles ~24 MiB)
_VMEM_CAP_BYTES = 48 * 1024 * 1024      # headroom below v7x's 64 MiB physical VMEM
_VMEM_FLOOR_BYTES = 16 * 1024 * 1024

_ROW_SEMANTICS = None                   # resolved once per process


def _sublane_pack(dtype) -> int:
    # rows-per-sublane packing: f32 -> 8, bf16 -> 16, int8/fp8 -> 32
    return {4: 8, 2: 16, 1: 32}.get(jnp.dtype(dtype).itemsize, 8)


def _device_kind() -> str:
    try:
        return jax.devices()[0].device_kind.lower()
    except Exception:
        return ""


def _compute_dtype_name(io_dtype) -> str:
    # bf16 compute only where the VPU/EUP have bf16 datapaths (v6e / v7x);
    # everywhere else (v5e etc.) keep the f32 path.
    kind = _device_kind()
    if jnp.dtype(io_dtype) == jnp.dtype(jnp.bfloat16) and ("v6" in kind or "v7" in kind):
        return "bfloat16"
    return "float32"


def _dyt_kernel(alpha_ref, gamma_ref, beta_ref, x_ref, o_ref, *, compute_dtype):
    # alpha_ref: SMEM (1,) f32; gamma/beta: VMEM (1, W) grid-resident in compute
    # dtype; x/o: VMEM (block_rows, W) tiles in the I/O dtype.
    alpha = alpha_ref[0].astype(compute_dtype)
    x = x_ref[...].astype(compute_dtype)          # no-op when I/O dtype == compute dtype
    t = jnp.tanh(alpha * x)                       # EUP
    y = gamma_ref[...] * t + beta_ref[...]        # VPU mul + add, (1, W) broadcasts
    o_ref[...] = y.astype(o_ref.dtype)


@functools.partial(
    jax.jit,
    static_argnames=("fold", "rows_main", "compute_dtype_name", "semantics"),
)
def _dyt_impl(x, alpha, gamma, beta, *, fold, rows_main, compute_dtype_name, semantics):
    compute_dtype = jnp.dtype(compute_dtype_name)
    orig_shape = x.shape
    d_model = orig_shape[-1]
    x2d = x.reshape(-1, d_model)
    n_rows = x2d.shape[0]

    alpha_s = alpha.reshape(1).astype(jnp.float32)      # SMEM scalar (32-bit)
    gamma_c = gamma.astype(compute_dtype)
    beta_c = beta.astype(compute_dtype)

    pieces = []

    if rows_main > 0:
        rows = rows_main // fold
        width = d_model * fold                           # always a multiple of 128
        # NOTE: for the (rare) ragged case rows_main < n_rows this prefix slice
        # materializes a copy; it is still much cheaper than the masked narrow-
        # store fallback for the whole tensor.
        xw = x2d[:rows_main].reshape(rows, width)
        gamma_w = jnp.tile(gamma_c, (fold,)).reshape(1, width)
        beta_w = jnp.tile(beta_c, (fold,)).reshape(1, width)

        itemsize = jnp.dtype(x.dtype).itemsize
        pack = _sublane_pack(x.dtype)
        block_rows = max(pack, _TARGET_TILE_BYTES // max(1, width * itemsize))
        block_rows = (block_rows // pack) * pack
        if block_rows >= rows:
            block_rows = rows                            # full-extent block is layout-legal

        # Scoped-VMEM budget from the actual footprint:
        #   2 double-buffered input tiles + 2 output tiles + resident gamma/beta + margin.
        tile_bytes = block_rows * width * itemsize
        param_bytes = 2 * 2 * width * compute_dtype.itemsize
        vmem_limit = int(4 * tile_bytes + param_bytes + (4 << 20))
        vmem_limit = int(min(max(vmem_limit, _VMEM_FLOOR_BYTES), _VMEM_CAP_BYTES))

        grid = (pl.cdiv(rows, block_rows),)

        yw = pl.pallas_call(
            functools.partial(_dyt_kernel, compute_dtype=compute_dtype),
            out_shape=jax.ShapeDtypeStruct((rows, width), x.dtype),
            grid_spec=pltpu.PrefetchScalarGridSpec(
                num_scalar_prefetch=0,
                grid=grid,
                in_specs=[
                    pl.BlockSpec(memory_space=pltpu.MemorySpace.SMEM),        # alpha
                    pl.BlockSpec((1, width), lambda i: (0, 0)),               # gamma (resident)
                    pl.BlockSpec((1, width), lambda i: (0, 0)),               # beta  (resident)
                    pl.BlockSpec((block_rows, width), lambda i: (i, 0)),      # x tile
                ],
                out_specs=pl.BlockSpec((block_rows, width), lambda i: (i, 0)),
            ),
            compiler_params=pltpu.CompilerParams(
                dimension_semantics=semantics,
                vmem_limit_bytes=vmem_limit,
            ),
        )(alpha_s, gamma_w, beta_w, xw)
        pieces.append(yw.reshape(rows_main, d_model))

    if rows_main < n_rows:
        # <= fold-1 (< 128) leftover rows: tiny, handled with plain XLA ops — a
        # dedicated narrow-last-dim pallas_call would be masked-store bound anyway.
        xr = x2d[rows_main:].astype(compute_dtype)
        yr = gamma_c * jnp.tanh(alpha_s.astype(compute_dtype) * xr) + beta_c
        pieces.append(yr.astype(x.dtype))

    out2d = pieces[0] if len(pieces) == 1 else jnp.concatenate(pieces, axis=0)
    return out2d.reshape(orig_shape)


def dyt_forward(x, alpha, gamma, beta):
    """x: (..., d_model). alpha: (1,), gamma/beta: (d_model,)."""
    global _ROW_SEMANTICS

    d_model = x.shape[-1]
    n_rows = math.prod(x.shape[:-1]) if len(x.shape) > 1 else 1

    fold = 1
    if d_model % _LANE != 0:
        fold = _LANE // math.gcd(d_model, _LANE)
    rows_main = (n_rows // fold) * fold

    cd_name = _compute_dtype_name(x.dtype)

    if _ROW_SEMANTICS is None:
        _ROW_SEMANTICS = ("parallel",)
        if "v7" in _device_kind():
            # v7x has 2 TensorCores/chip; CORE_PARALLEL is what actually shards
            # the row grid across them. Fall back cleanly if the lowering rejects it.
            try:
                sem = (pltpu.CORE_PARALLEL,)
                out = _dyt_impl(x, alpha, gamma, beta, fold=fold, rows_main=rows_main,
                                compute_dtype_name=cd_name, semantics=sem)
                jax.block_until_ready(out)
                _ROW_SEMANTICS = sem
                return out
            except Exception:
                _ROW_SEMANTICS = ("parallel",)

    return _dyt_impl(x, alpha, gamma, beta, fold=fold, rows_main=rows_main,
                     compute_dtype_name=cd_name, semantics=_ROW_SEMANTICS)


if __name__ == "__main__":
    # Config implied by DyT.__init__: d_model, init_alpha.
    batch, seq, d_model = 2, 8, 32
    init_alpha = 0.5

    key = jax.random.PRNGKey(0)
    x = jax.random.normal(key, (batch, seq, d_model), dtype=jnp.float32)

    # Deterministic parameter init (matches nn.Parameter shapes in __init__).
    alpha = jnp.full((1,), init_alpha, dtype=jnp.float32)   # init_alpha * ones(1)
    gamma = jnp.ones((d_model,), dtype=jnp.float32)         # ones(d_model)
    beta = jnp.zeros((d_model,), dtype=jnp.float32)         # zeros(d_model)

    out = jax.block_until_ready(dyt_forward(x, alpha, gamma, beta))
    ref = gamma * jnp.tanh(alpha * x) + beta
    assert out.shape == x.shape
    assert jnp.allclose(out, ref, atol=1e-5, rtol=1e-5)

    # Ragged d_model (not a multiple of 128) with a row count NOT divisible by the
    # fold factor -> folded lane-dense main body + tiny jnp remainder.
    d2 = 48
    x2 = jax.random.normal(jax.random.PRNGKey(1), (3, 7, d2), dtype=jnp.float32)
    a2 = jnp.full((1,), 0.7, dtype=jnp.float32)
    g2 = jax.random.normal(jax.random.PRNGKey(2), (d2,), dtype=jnp.float32)
    b2 = jax.random.normal(jax.random.PRNGKey(3), (d2,), dtype=jnp.float32)
    out2 = jax.block_until_ready(dyt_forward(x2, a2, g2, b2))
    ref2 = g2 * jnp.tanh(a2 * x2) + b2
    assert jnp.allclose(out2, ref2, atol=1e-5, rtol=1e-5)

    # Multi-tile grid path: several pipelined row tiles plus a ragged last tile.
    d3 = 512
    x3 = jax.random.normal(jax.random.PRNGKey(4), (8192, d3), dtype=jnp.float32)
    g3 = jax.random.normal(jax.random.PRNGKey(5), (d3,), dtype=jnp.float32)
    b3 = jax.random.normal(jax.random.PRNGKey(6), (d3,), dtype=jnp.float32)
    out3 = jax.block_until_ready(dyt_forward(x3, alpha, g3, b3))
    ref3 = g3 * jnp.tanh(alpha * x3) + b3
    assert jnp.allclose(out3, ref3, atol=1e-5, rtol=1e-5)

    # bf16 I/O path (bf16 compute on v6e/v7x, f32 compute elsewhere).
    xb = jax.random.normal(jax.random.PRNGKey(7), (2, 8, 256)).astype(jnp.bfloat16)
    gb = jax.random.normal(jax.random.PRNGKey(8), (256,)).astype(jnp.bfloat16)
    bb = jax.random.normal(jax.random.PRNGKey(9), (256,)).astype(jnp.bfloat16)
    ab = jnp.full((1,), 0.8, dtype=jnp.bfloat16)
    outb = jax.block_until_ready(dyt_forward(xb, ab, gb, bb))
    refb = (gb.astype(jnp.float32) * jnp.tanh(ab.astype(jnp.float32) * xb.astype(jnp.float32))
            + bb.astype(jnp.float32))
    assert outb.dtype == jnp.bfloat16
    assert jnp.allclose(outb.astype(jnp.float32), refb, atol=1e-1, rtol=5e-2)

    print("KERNEL_OK")
</pallas_src>

<mosaic_0001>
module attributes {stable_mosaic.version = 11 : i64} {
  func.func @_dyt_kernel(%arg0: i32, %arg1: memref<1xf32, #tpu.memory_space<smem>>, %arg2: memref<1x128xf32, #tpu.memory_space<vmem>>, %arg3: memref<1x128xf32, #tpu.memory_space<vmem>>, %arg4: memref<4x128xf32, #tpu.memory_space<vmem>>, %arg5: memref<4x128xf32, #tpu.memory_space<vmem>>) attributes {dimension_semantics = [#tpu.dimension_semantics<parallel>], iteration_bounds = array<i64: 1>, scalar_prefetch = 0 : i64, scratch_operands = 0 : i64, tpu.core_type = #tpu.core_type<tc>, window_params = [{transform_indices = @transform_0, window_bounds = array<i64: 1>}, {pipeline_mode = #tpu.pipeline_mode<synchronous>, transform_indices = @transform_1, window_bounds = array<i64: 1, 128>}, {pipeline_mode = #tpu.pipeline_mode<synchronous>, transform_indices = @transform_2, window_bounds = array<i64: 1, 128>}, {transform_indices = @transform_3, window_bounds = array<i64: 4, 128>}, {transform_indices = @transform_4, window_bounds = array<i64: 4, 128>}]} {
    %c0 = arith.constant 0 : index
    %0 = memref.load %arg1[%c0] : memref<1xf32, #tpu.memory_space<smem>>
    %c0_0 = arith.constant 0 : index
    %c0_1 = arith.constant 0 : index
    %1 = vector.load %arg4[%c0_0, %c0_1] : memref<4x128xf32, #tpu.memory_space<vmem>>, vector<4x128xf32>
    %2 = vector.broadcast %0 : f32 to vector<4x128xf32>
    %3 = arith.mulf %2, %1 : vector<4x128xf32>
    %4 = math.tanh %3 : vector<4x128xf32>
    %c0_2 = arith.constant 0 : index
    %c0_3 = arith.constant 0 : index
    %5 = vector.load %arg2[%c0_2, %c0_3] : memref<1x128xf32, #tpu.memory_space<vmem>>, vector<1x128xf32>
    %6 = vector.broadcast %5 : vector<1x128xf32> to vector<4x128xf32>
    %7 = arith.mulf %6, %4 : vector<4x128xf32>
    %c0_4 = arith.constant 0 : index
    %c0_5 = arith.constant 0 : index
    %8 = vector.load %arg3[%c0_4, %c0_5] : memref<1x128xf32, #tpu.memory_space<vmem>>, vector<1x128xf32>
    %9 = vector.broadcast %8 : vector<1x128xf32> to vector<4x128xf32>
    %10 = arith.addf %7, %9 : vector<4x128xf32>
    %c0_6 = arith.constant 0 : index
    %c0_7 = arith.constant 0 : index
    %11 = vector.load %arg5[%c0_6, %c0_7] : memref<4x128xf32, #tpu.memory_space<vmem>>, vector<4x128xf32>
    tpu.vector_store %arg5[%c0_6, %c0_7], %10 {strides = array<i32>} : memref<4x128xf32, #tpu.memory_space<vmem>>, vector<4x128xf32>,
    return
  }
  func.func @transform_0(%arg0: i32) -> i32 {
    %c0_i32 = arith.constant 0 : i32
    %c0_i32_0 = arith.constant 0 : i32
    return %c0_i32 : i32
  }
  func.func @transform_1(%arg0: i32) -> (i32, i32) {
    %c0_i32 = arith.constant 0 : i32
    %c0_i32_0 = arith.constant 0 : i32
    %c0_i32_1 = arith.constant 0 : i32
    return %c0_i32, %c0_i32_0 : i32, i32
  }
  func.func @transform_2(%arg0: i32) -> (i32, i32) {
    %c0_i32 = arith.constant 0 : i32
    %c0_i32_0 = arith.constant 0 : i32
    %c0_i32_1 = arith.constant 0 : i32
    return %c0_i32, %c0_i32_0 : i32, i32
  }
  func.func @transform_3(%arg0: i32) -> (i32, i32) {
    %c0_i32 = arith.constant 0 : i32
    %c0_i32_0 = arith.constant 0 : i32
    return %arg0, %c0_i32 : i32, i32
  }
  func.func @transform_4(%arg0: i32) -> (i32, i32) {
    %c0_i32 = arith.constant 0 : i32
    %c0_i32_0 = arith.constant 0 : i32
    return %arg0, %c0_i32 : i32, i32
  }
}

</mosaic_0001>

<llo_original>
// kernel: tile.14
$region0: #{tile.14}
  %s0 = inlined_call_operand.vmem [shape: f32[4,32], index: 0, kind: input, shape index: {}]
  %s1 = inlined_call_operand.vmem [shape: f32[1,128], index: 1, kind: output, shape index: {}]
  $region1: #{tile.14} parent=0
    #allocation0 [shape = 'u8[4096]{0}', space=vmem, size = 0x1000, scoped, tag = 'scoped mem for output reshape']
    #allocation1 [shape = 'u8[4096]{0}', space=vmem, size = 0x1000, scoped, tag = 'scoped mem for input reshape']
    %s3 = sshll.u32 1, 4
    %s4 = ssub.s32 %s3, 1
    %v5 = vld [vmem:[%s0] sm:%s4]
    %6 = vst [vmem:[#allocation1] sm:%s4] %v5
    %v7 = vld [vmem:[#allocation1] sm:$0x1]
    %vm8 = vcmask 261120
    %9 = vst.msk [vmem:[#allocation0] sm:$0x1] %vm8, %v7
    %s10 = scalar_lea.vmem [#allocation1], 3
    %v11 = vld [vmem:[%s10] sm:$0x1]
    %12 = vrot.lane.b32.xlu0 %v11, 96
    %v13 = vpop.permute.xlu0 %12
    %vm14 = vcmask 1048320
    %15 = vst.msk [vmem:[#allocation0] sm:$0x1] %vm14, %v13
    %s16 = scalar_lea.vmem [#allocation1], 2
    %v17 = vld [vmem:[%s16] sm:$0x1]
    %18 = vrot.lane.b32.xlu0 %v17, 64
    %v19 = vpop.permute.xlu0 %18
    %vm20 = vcmask 785920
    %21 = vst.msk [vmem:[#allocation0] sm:$0x1] %vm20, %v19
    %s22 = scalar_lea.vmem [#allocation1], 1
    %v23 = vld [vmem:[%s22] sm:$0x1]
    %24 = vrot.lane.b32.xlu0 %v23, 32
    %v25 = vpop.permute.xlu0 %24
    %vm26 = vcmask 523520
    %27 = vst.msk [vmem:[#allocation0] sm:$0x1] %vm26, %v25
    %s29 = sshll.u32 1, 1
    %s30 = ssub.s32 %s29, 1
    %v32 = vld [vmem:[#allocation0] sm:%s30]
    %s33 = sshll.u32 1, 1
    %s34 = ssub.s32 %s33, 1
    %35 = vst [vmem:[%s1] sm:%s34] %v32

// kernel: tile.13
$region0: #{tile.13}
  #allocation0 [shape = 's32[1]{0}', space=sflag, size = 0x4, scoped, tag = 'scoped memory for tile.13']
  %s0 = inlined_call_operand.vmem [shape: f32[32], index: 0, kind: input, shape index: {}]
  %s1 = inlined_call_operand.vmem [shape: f32[4,32], index: 1, kind: output, shape index: {}]
  // Predicated region
  $region2: #{tile.13} parent=0 // pred_check
    _
  $region3: #{tile.13} parent=0 // pred_check_branch
    %3 = sbr.rel (0) target = $region5
  $region4: #{tile.13} parent=0 // pred_region
    _
  $region5: #{tile.13} parent=0 // pred_fallthru
    _
  %v4 = vld [vmem:[%s0] ss:$0 sm:$0xff]
  %5 = vst [vmem:[%s1] sm:$0xf] %v4

// kernel: _dyt_impl.1
$region0: #{_dyt_impl.1}
  #allocation0 [shape = 'u32[]', space=smem, size = 0x4, offset = 0x4, fixed_abs, tag = 'smem constant byte address 0x4 - core index']
  #allocation1 [shape = 'u32[144,128]{1,0:T(1,128)}', space=vmem, size = 0x12000, scoped, tag = 'internal scratch']
  #allocation2 [shape = 'f32[1]{0:T(128)S(6)}', space=smem, size = 0x200, scoped, tag = 'scoped memory for _dyt_impl.1']
  %s0 = inlined_call_operand.<no memory space> [shape: f32[1], index: 0, kind: input, shape index: {}]
  %s1 = inlined_call_operand.vmem [shape: f32[1,128], index: 1, kind: input, shape index: {}]
  %s2 = inlined_call_operand.vmem [shape: f32[1,128], index: 2, kind: input, shape index: {}]
  %s3 = inlined_call_operand.vmem [shape: f32[4,128], index: 3, kind: input, shape index: {}]
  %s4 = inlined_call_operand.vmem [shape: f32[4,128], index: 4, kind: output, shape index: {}]
  %s5 = sld [smem:[#allocation0]]
  $region26: #{_dyt_impl.1} parent=0
    _
  %s7 = ssub.s32 1, %s5
  %s8 = scalar_select 0, %s7, %s5
  %9 = sst [smem:[#allocation2]] %s0
  // Predicated region
  $region2: #{_dyt_impl.1} parent=0 // pred_check
    _
  $region3: #{_dyt_impl.1} parent=0 // pred_check_branch
    %11 = sbr.rel (0) target = $region5
  $region4: #{_dyt_impl.1} parent=0 // pred_region
    _
  $region5: #{_dyt_impl.1} parent=0 // pred_fallthru
    _
  // Predicated region
  $region6: #{_dyt_impl.1} parent=0 // pred_check
    _
  $region7: #{_dyt_impl.1} parent=0 // pred_check_branch
    %13 = sbr.rel (0) target = $region9
  $region8: #{_dyt_impl.1} parent=0 // pred_region
    _
  $region9: #{_dyt_impl.1} parent=0 // pred_fallthru
    _
  // Predicated region
  $region10: #{_dyt_impl.1} parent=0 // pred_check
    _
  $region11: #{_dyt_impl.1} parent=0 // pred_check_branch
    %15 = sbr.rel (0) target = $region13
  $region12: #{_dyt_impl.1} parent=0 // pred_region
    _
  $region13: #{_dyt_impl.1} parent=0 // pred_fallthru
    _
  // Predicated region
  $region14: #{_dyt_impl.1} parent=0 // pred_check
    _
  $region15: #{_dyt_impl.1} parent=0 // pred_check_branch
    %17 = sbr.rel (0) target = $region17
  $region16: #{_dyt_impl.1} parent=0 // pred_region
    _
  $region17: #{_dyt_impl.1} parent=0 // pred_fallthru
    _
  %s18 = sld [smem:[#allocation2]]
  %v19 = vld [vmem:[%s3] sm:$0xf]
  %v20 = vstv %s18
  %v21 = vmul.f32 %v20, %v19
  %v22 = vtanh.pop %v21
  %v23 = vld [vmem:[%s1] sm:$0x1]
  %v25 = vlaneseq
  %v26 = vshrl.u32 %v25, 7
  %v27 = vsub.s32 0, %v26
  %v28 = vrot.slane %v23, %v27
  %v30 = vmul.f32 %v28, %v22
  %v31 = vld [vmem:[%s2] sm:$0x1]
  %v33 = vlaneseq
  %v34 = vshrl.u32 %v33, 7
  %v35 = vsub.s32 0, %v34
  %v36 = vrot.slane %v31, %v35
  %v38 = vadd.f32 %v30, %v36
  %39 = vst [vmem:[%s4] sm:$0xf] %v38
  // Predicated region
  $region18: #{_dyt_impl.1} parent=0 // pred_check
    _
  $region19: #{_dyt_impl.1} parent=0 // pred_check_branch
    %41 = sbr.rel (0) target = $region21
  $region20: #{_dyt_impl.1} parent=0 // pred_region
    _
  $region21: #{_dyt_impl.1} parent=0 // pred_fallthru
    _
  // Predicated region
  $region22: #{_dyt_impl.1} parent=0 // pred_check
    _
  $region23: #{_dyt_impl.1} parent=0 // pred_check_branch
    %43 = sbr.rel (0) target = $region25
  $region24: #{_dyt_impl.1} parent=0 // pred_region
    _
  $region25: #{_dyt_impl.1} parent=0 // pred_fallthru
    _

</llo_original>
